<compile_context>
chip_gen: v7x
topology: tpu7x:2x2x1
jax: 0.10.0
libtpu: 0.0.40
codegen_flags: <defaults>
</compile_context>

<pallas_src>
import jax
import jax.numpy as jnp
from jax.experimental import pallas as pl
from jax.experimental.pallas import tpu as pltpu


# --------------------------------------------------------------------------- #
# Kernels
# --------------------------------------------------------------------------- #
def _torgb_kernel_skip(x_ref, w_ref, b_ref, s_ref, u_ref, o_ref):
    x = x_ref[...]                                       # (Cin, T)
    # F.leaky_relu(input, 20.0): negative_slope = 20.0
    act = jnp.where(x >= 0.0, x, x * 20.0)
    # 1x1 conv == channel matmul: (3, Cin) @ (Cin, T) -> lane-dense (3, T)
    out = jnp.dot(w_ref[...], act, preferred_element_type=jnp.float32)
    out = out + b_ref[...]                               # (3, 1) bias broadcast
    # fused nearest 2x upsample of the low-res skip tile:
    # (3, Q) @ one-hot (Q, T)  ==  skip[c, q_of_p]  for every hi-res pixel p
    out = out + jnp.dot(s_ref[...], u_ref[...], preferred_element_type=jnp.float32)
    o_ref[...] = out.astype(o_ref.dtype)


def _torgb_kernel_noskip(x_ref, w_ref, b_ref, o_ref):
    x = x_ref[...]                                       # (Cin, T)
    act = jnp.where(x >= 0.0, x, x * 20.0)
    out = jnp.dot(w_ref[...], act, preferred_element_type=jnp.float32)
    o_ref[...] = (out + b_ref[...]).astype(o_ref.dtype)


# --------------------------------------------------------------------------- #
# Parameter glue (run once per weight update, NOT per forward)
# --------------------------------------------------------------------------- #
def prepare_torgb_params(conv_weight, conv_bias, eps=1e-12):
    """spectral-norm the 1x1 conv weight.  conv_weight: (3, Cin, 1, 1).

    Returns (w (3, Cin), bias (3, 1)).  Exact SVD is used instead of PyTorch's
    power iteration (deterministic, no running-u state); eps guards sigma~0."""
    cout = conv_weight.shape[0]
    w2d = conv_weight.reshape(cout, -1)
    sigma = jnp.linalg.svd(w2d, compute_uv=False)[0]
    w2d = w2d / jnp.maximum(sigma, eps)
    return w2d, conv_bias.reshape(cout, 1)


# --------------------------------------------------------------------------- #
# Tile selection
# --------------------------------------------------------------------------- #
def _pick_tile_p(HW, W, with_skip, n_imgs, max_tile=2048):
    """Largest legal pixel-tile size <= max_tile.

    Legal means: divides HW; last block dim is a multiple of 128 or the full
    dim; if skip is fused, the tile covers whole even row-pairs (multiple of
    2*W) so the low-res tile is contiguous and the same one-hot upsample matrix
    works for every tile."""
    def legal(t):
        if HW % t:
            return False
        if t % 128 and t != HW:
            return False
        if with_skip:
            if t % (2 * W):
                return False
            if (t // 4) % 128 and t != HW:
                return False
        return True

    cands = [t for t in range(1, min(HW, max_tile) + 1) if legal(t)]
    if not cands:
        cands = [HW]  # full-image block is always legal (block dims == array dims)
    # keep the grid >= 2 steps when possible (v7x: 2 TensorCores per chip)
    multi = [t for t in cands if n_imgs * (HW // t) >= 2]
    return max(multi) if multi else max(cands)


# --------------------------------------------------------------------------- #
# Forward
# --------------------------------------------------------------------------- #
def torgb_forward(x, w_oc, bias, skip=None, *, max_tile=2048):
    """x: (N, Cin, H, W) NCHW; w_oc: (3, Cin) spectral-normalized; bias: (3, 1);
    skip: (N, 3, H//2, W//2) or None.  Returns (N, 3, H, W)."""
    N, Cin, H, W = x.shape
    Cout = w_oc.shape[0]
    HW = H * W
    with_skip = skip is not None
    if with_skip:
        assert H % 2 == 0 and W % 2 == 0, "2x nearest upsample needs even H, W"
        assert skip.shape == (N, Cout, H // 2, W // 2)

    tile_p = _pick_tile_p(HW, W, with_skip, N, max_tile)
    n_tiles = HW // tile_p

    # NCHW is already channels-first: flattening the spatial dims is a pure
    # reshape -- no extra HBM transpose pass for input or output.
    x_flat = x.reshape(N, Cin, HW)
    w_k = w_oc.astype(x.dtype)                 # (3, Cin)
    b_k = bias.reshape(Cout, 1).astype(jnp.float32)

    in_specs = [
        pl.BlockSpec((None, Cin, tile_p), lambda n, i: (n, 0, i)),   # x tile (lane-dense)
        pl.BlockSpec((Cout, Cin), lambda n, i: (0, 0)),              # weight (resident)
        pl.BlockSpec((Cout, 1), lambda n, i: (0, 0)),                # bias   (resident)
    ]
    args = [x_flat, w_k, b_k]

    if with_skip:
        Q = tile_p // 4
        skip_flat = skip.reshape(N, Cout, HW // 4)       # low-res, NOT pre-upsampled
        # One-hot nearest-upsample matrix, identical for every tile because
        # tile_p is a multiple of 2*W (tiles cover whole even row-pairs).
        p = jnp.arange(tile_p)
        q_of_p = (p // W // 2) * (W // 2) + (p % W) // 2  # hi-res pixel -> low-res pixel
        u = (jnp.arange(Q)[:, None] == q_of_p[None, :]).astype(x.dtype)   # (Q, T)
        in_specs += [
            pl.BlockSpec((None, Cout, Q), lambda n, i: (n, 0, i)),   # low-res skip tile
            pl.BlockSpec((Q, tile_p), lambda n, i: (0, 0)),          # upsample matrix (resident)
        ]
        args += [skip_flat, u]
        kernel = _torgb_kernel_skip
    else:
        kernel = _torgb_kernel_noskip

    out_flat = pl.pallas_call(
        kernel,
        out_shape=jax.ShapeDtypeStruct((N, Cout, HW), x.dtype),
        grid_spec=pltpu.PrefetchScalarGridSpec(
            num_scalar_prefetch=0,
            grid=(N, n_tiles),
            in_specs=in_specs,
            out_specs=pl.BlockSpec((None, Cout, tile_p), lambda n, i: (n, 0, i)),
        ),
        compiler_params=pltpu.CompilerParams(
            dimension_semantics=("parallel", "parallel"),
            vmem_limit_bytes=48 * 1024 * 1024,   # above v5e's 16 MiB default, safe on v7x's 64 MiB
        ),
    )(*args)

    return out_flat.reshape(N, Cout, H, W)


# --------------------------------------------------------------------------- #
# Pure-JAX reference (mirrors the PyTorch forward)
# --------------------------------------------------------------------------- #
def _reference(x, conv_weight, conv_bias, skip):
    Cout = conv_weight.shape[0]
    w2d = conv_weight.reshape(Cout, -1)
    sigma = jnp.linalg.svd(w2d, compute_uv=False)[0]
    w2d = w2d / jnp.maximum(sigma, 1e-12)
    act = jnp.where(x >= 0.0, x, x * 20.0)
    out = jnp.einsum("nchw,oc->nohw", act, w2d) + conv_bias[None, :, None, None]
    if skip is not None:
        out = out + jnp.repeat(jnp.repeat(skip, 2, axis=2), 2, axis=3)
    return out


if __name__ == "__main__":
    key = jax.random.PRNGKey(0)
    k_x, k_w, k_b, k_s = jax.random.split(key, 4)

    N, Cin, H, W = 2, 4, 16, 16
    x = jax.random.normal(k_x, (N, Cin, H, W), jnp.float32)
    conv_weight = jax.random.normal(k_w, (3, Cin, 1, 1), jnp.float32) * 0.1
    conv_bias = jax.random.normal(k_b, (3,), jnp.float32) * 0.1
    skip = jax.random.normal(k_s, (N, 3, H // 2, W // 2), jnp.float32)

    # spectral norm hoisted out of the per-call path (once per weight update)
    w_oc, b_col = prepare_torgb_params(conv_weight, conv_bias)

    # with skip (fused in-kernel 2x nearest upsample)
    out = jax.block_until_ready(torgb_forward(x, w_oc, b_col, skip))
    ref = _reference(x, conv_weight, conv_bias, skip)
    assert out.shape == (N, 3, H, W)
    assert jnp.max(jnp.abs(out - ref)) < 1e-4, "mismatch vs reference (skip)"

    # without skip (dedicated kernel variant -- no zero stream)
    out2 = jax.block_until_ready(torgb_forward(x, w_oc, b_col, None))
    ref2 = _reference(x, conv_weight, conv_bias, None)
    assert jnp.max(jnp.abs(out2 - ref2)) < 1e-4, "mismatch vs reference (no skip)"

    print("KERNEL_OK")
</pallas_src>

<mosaic_0001>
module attributes {stable_mosaic.version = 11 : i64} {
  func.func @_torgb_kernel_skip(%arg0: i32, %arg1: i32, %arg2: memref<1x4x256xf32, #tpu.memory_space<vmem>>, %arg3: memref<3x4xf32, #tpu.memory_space<vmem>>, %arg4: memref<3x1xf32, #tpu.memory_space<vmem>>, %arg5: memref<1x3x64xf32, #tpu.memory_space<vmem>>, %arg6: memref<64x256xf32, #tpu.memory_space<vmem>>, %arg7: memref<1x3x256xf32, #tpu.memory_space<vmem>>) attributes {dimension_semantics = [#tpu.dimension_semantics<parallel>, #tpu.dimension_semantics<parallel>], iteration_bounds = array<i64: 2, 1>, scalar_prefetch = 0 : i64, scratch_operands = 0 : i64, tpu.core_type = #tpu.core_type<tc>, window_params = [{transform_indices = @transform_0, window_bounds = array<i64: 1, 4, 256>}, {pipeline_mode = #tpu.pipeline_mode<synchronous>, transform_indices = @transform_1, window_bounds = array<i64: 3, 4>}, {pipeline_mode = #tpu.pipeline_mode<synchronous>, transform_indices = @transform_2, window_bounds = array<i64: 3, 1>}, {transform_indices = @transform_3, window_bounds = array<i64: 1, 3, 64>}, {pipeline_mode = #tpu.pipeline_mode<synchronous>, transform_indices = @transform_4, window_bounds = array<i64: 64, 256>}, {transform_indices = @transform_5, window_bounds = array<i64: 1, 3, 256>}]} {
    %c0 = arith.constant 0 : index
    %c0_0 = arith.constant 0 : index
    %c0_1 = arith.constant 0 : index
    %0 = vector.load %arg2[%c0, %c0_0, %c0_1] : memref<1x4x256xf32, #tpu.memory_space<vmem>>, vector<1x4x256xf32>
    %1 = vector.shape_cast %0 : vector<1x4x256xf32> to vector<4x256xf32>
    %cst = arith.constant 0.000000e+00 : f32
    %2 = vector.broadcast %cst : f32 to vector<4x256xf32>
    %3 = arith.cmpf oge, %1, %2 : vector<4x256xf32>
    %cst_2 = arith.constant 2.000000e+01 : f32
    %4 = vector.broadcast %cst_2 : f32 to vector<4x256xf32>
    %5 = arith.mulf %1, %4 : vector<4x256xf32>
    %6 = arith.select %3, %1, %5 : vector<4x256xi1>, vector<4x256xf32>
    %c0_3 = arith.constant 0 : index
    %c0_4 = arith.constant 0 : index
    %7 = vector.load %arg3[%c0_3, %c0_4] : memref<3x4xf32, #tpu.memory_space<vmem>>, vector<3x4xf32>
    %cst_5 = arith.constant dense<0.000000e+00> : vector<3x256xf32>
    %8 = tpu.matmul %7, %6, %cst_5 {dimension_numbers = #tpu.dot_dimension_numbers<[1], [0], [0], [1], [0, 0, 1, 1], [], []>} : vector<3x4xf32>, vector<4x256xf32>, vector<3x256xf32> -> vector<3x256xf32>
    %c0_6 = arith.constant 0 : index
    %c0_7 = arith.constant 0 : index
    %9 = vector.load %arg4[%c0_6, %c0_7] : memref<3x1xf32, #tpu.memory_space<vmem>>, vector<3x1xf32>
    %10 = vector.broadcast %9 : vector<3x1xf32> to vector<3x256xf32>
    %11 = arith.addf %8, %10 : vector<3x256xf32>
    %c0_8 = arith.constant 0 : index
    %c0_9 = arith.constant 0 : index
    %c0_10 = arith.constant 0 : index
    %12 = vector.load %arg5[%c0_8, %c0_9, %c0_10] : memref<1x3x64xf32, #tpu.memory_space<vmem>>, vector<1x3x64xf32>
    %13 = vector.shape_cast %12 : vector<1x3x64xf32> to vector<3x64xf32>
    %c0_11 = arith.constant 0 : index
    %c0_12 = arith.constant 0 : index
    %14 = vector.load %arg6[%c0_11, %c0_12] : memref<64x256xf32, #tpu.memory_space<vmem>>, vector<64x256xf32>
    %cst_13 = arith.constant dense<0.000000e+00> : vector<3x256xf32>
    %15 = tpu.matmul %13, %14, %cst_13 {dimension_numbers = #tpu.dot_dimension_numbers<[1], [0], [0], [1], [0, 0, 1, 1], [], []>} : vector<3x64xf32>, vector<64x256xf32>, vector<3x256xf32> -> vector<3x256xf32>
    %16 = arith.addf %11, %15 : vector<3x256xf32>
    %c0_14 = arith.constant 0 : index
    %c0_15 = arith.constant 0 : index
    %c0_16 = arith.constant 0 : index
    %17 = vector.load %arg7[%c0_14, %c0_15, %c0_16] : memref<1x3x256xf32, #tpu.memory_space<vmem>>, vector<1x3x256xf32>
    %18 = vector.shape_cast %17 : vector<1x3x256xf32> to vector<3x256xf32>
    %19 = vector.shape_cast %16 : vector<3x256xf32> to vector<1x3x256xf32>
    tpu.vector_store %arg7[%c0_14, %c0_15, %c0_16], %19 {strides = array<i32>} : memref<1x3x256xf32, #tpu.memory_space<vmem>>, vector<1x3x256xf32>,
    return
  }
  func.func @transform_0(%arg0: i32, %arg1: i32) -> (i32, i32, i32) {
    %c0_i32 = arith.constant 0 : i32
    %c0_i32_0 = arith.constant 0 : i32
    return %arg0, %c0_i32, %arg1 : i32, i32, i32
  }
  func.func @transform_1(%arg0: i32, %arg1: i32) -> (i32, i32) {
    %c0_i32 = arith.constant 0 : i32
    %c0_i32_0 = arith.constant 0 : i32
    %c0_i32_1 = arith.constant 0 : i32
    return %c0_i32, %c0_i32_0 : i32, i32
  }
  func.func @transform_2(%arg0: i32, %arg1: i32) -> (i32, i32) {
    %c0_i32 = arith.constant 0 : i32
    %c0_i32_0 = arith.constant 0 : i32
    %c0_i32_1 = arith.constant 0 : i32
    return %c0_i32, %c0_i32_0 : i32, i32
  }
  func.func @transform_3(%arg0: i32, %arg1: i32) -> (i32, i32, i32) {
    %c0_i32 = arith.constant 0 : i32
    %c0_i32_0 = arith.constant 0 : i32
    return %arg0, %c0_i32, %arg1 : i32, i32, i32
  }
  func.func @transform_4(%arg0: i32, %arg1: i32) -> (i32, i32) {
    %c0_i32 = arith.constant 0 : i32
    %c0_i32_0 = arith.constant 0 : i32
    %c0_i32_1 = arith.constant 0 : i32
    return %c0_i32, %c0_i32_0 : i32, i32
  }
  func.func @transform_5(%arg0: i32, %arg1: i32) -> (i32, i32, i32) {
    %c0_i32 = arith.constant 0 : i32
    %c0_i32_0 = arith.constant 0 : i32
    return %arg0, %c0_i32, %arg1 : i32, i32, i32
  }
}

</mosaic_0001>

<llo_original>
// kernel: tpu_custom_call.1
$region0: #{tpu_custom_call.1}
  #allocation0 [shape = 'u32[]', space=smem, size = 0x4, offset = 0x4, fixed_abs, tag = 'smem constant byte address 0x4 - core index']
  #allocation1 [shape = 'u32[144,128]{1,0:T(1,128)}', space=vmem, size = 0x12000, scoped, tag = 'internal scratch']
  %s0 = inlined_call_operand.vmem [shape: f32[2,4,256], index: 0, kind: input, shape index: {}]
  %s1 = inlined_call_operand.vmem [shape: f32[3,4], index: 1, kind: input, shape index: {}]
  %s2 = inlined_call_operand.vmem [shape: f32[3,1], index: 2, kind: input, shape index: {}]
  %s3 = inlined_call_operand.vmem [shape: f32[2,3,64], index: 3, kind: input, shape index: {}]
  %s4 = inlined_call_operand.hbm [shape: f32[64,256], index: 4, kind: input, shape index: {}]
  %s5 = inlined_call_operand.vmem [shape: f32[2,3,256], index: 5, kind: output, shape index: {}]
  %s6 = sld [smem:[#allocation0]]
  $region57: #{tpu_custom_call.1} parent=0
    _
  %s8 = ssub.s32 1, %s6
  %s9 = scalar_select 0, %s8, %s6
  $region1: #{tpu_custom_call.1} parent=0
    #allocation2 [shape = 'u8[65536]{0}', space=vmem, size = 0x10000, scoped, tag = 'input window, operand 4, single buffered']
    #allocation3 [shape = 's32[2]{0}', space=sflag, size = 0x8, scoped, tag = 'scoped memory for tpu_custom_call.1']
    %10 = vsyncpa [#allocation3], 0
    loop: start=0, step=1, limit=4
    $region2: #{tpu_custom_call.1} parent=1 // loop_pre_header
      _
    $region3: #{tpu_custom_call.1} parent=1 // loop_header
      %s12 = sphi 0, %s16
      %p13 = scmp.ge.s32.totalorder %s12, 4
      %s19 = sphi 0, %s31
      %s20 = sphi 0, %s27
      %s21 = sphi 0, %s19
      %s22 = sphi 0, %s20
      %s23 = sphi 0, %s21
      %s24 = sphi 0, %s22
      %s36 = sphi 0, %s38
      %s39 = sphi 0, %s36
      %s40 = sphi 0, %s39
      %s56 = sphi 0, %s40
      %s60 = sphi 0, %s60
      %s62 = sphi 0, %s60
      %s63 = sphi 0, %s62
      %s77 = sphi 0, %s63
      %s81 = sphi 0, %s81
      %s83 = sphi 0, %s81
      %s84 = sphi 0, %s83
      %s98 = sphi 0, %s84
      %s106 = sphi 0, %s108
      %s109 = sphi 0, %s106
      %s110 = sphi 0, %s109
      %s126 = sphi 0, %s110
      %s130 = sphi 0, %s130
      %s132 = sphi 0, %s130
      %s133 = sphi 0, %s132
      %s147 = sphi 0, %s133
      %s155 = sphi 0, %s157
      %s158 = sphi 0, %s155
      %s159 = sphi 0, %s158
      %s175 = sphi 0, %s159
    $region4: #{tpu_custom_call.1} parent=1 // loop_header_branch
      %15 = sbr.rel (%p13) target = $region8
    $region5: #{tpu_custom_call.1} parent=1 // loop_body
      %s17 = ssub.s32 %s12, 1
      %s18 = ssub.s32 %s12, 2
      %s25 = sadd.s32 1, %s20
      %p26 = scmp.ge.s32.totalorder %s25, 1
      %s27 = scalar_select %p26, 0, %s25
      %s28 = sadd.s32 1, %s19
      %s29 = scalar_select %p26, %s28, %s19
      %p30 = scmp.ge.s32.totalorder %s29, 2
      %s31 = scalar_select %p30, 0, %s29
      %s32 = ssub.s32 %s19, %s31
      %s33 = ssub.s32 %s20, %s27
      %s34 = sor.u32 %s32, %s33
      %p35 = scmp.eq.s32.totalorder %s34, 0
      %s37 = sadd.s32 %s36, 1
      %s38 = scalar_select %p35, %s36, %s37
      %p41 = pneg %p35
      %p42 = scmp.eq.s32.totalorder %s12, 1
      %p43 = por %p41, %p42
      %p44 = scmp.ne.s32.totalorder %s36, %s39
      %p45 = scmp.eq.s32.totalorder %s12, 0
      %p46 = por %p44, %p45
      %p47 = scmp.ne.s32.totalorder %s36, %s39
      %p48 = scmp.eq.s32.totalorder %s17, 1
      %p49 = por %p47, %p48
      %p50 = scmp.ne.s32.totalorder %s39, %s40
      %p51 = scmp.eq.s32.totalorder %s17, 0
      %p52 = por %p50, %p51
      %p53 = scmp.ne.s32.totalorder %s39, %s40
      %p54 = scmp.eq.s32.totalorder %s18, 1
      %p55 = por %p53, %p54
      %p57 = scmp.ne.s32.totalorder %s40, %s56
      %p58 = scmp.eq.s32.totalorder %s18, 0
      %p59 = por %p57, %p58
      %s61 = sadd.s32 %s60, 1
      %p64 = scmp.eq.s32.totalorder %s12, 1
      %p65 = scmp.ne.s32.totalorder %s60, %s62
      %p66 = scmp.eq.s32.totalorder %s12, 0
      %p67 = por %p65, %p66
      %p68 = scmp.ne.s32.totalorder %s60, %s62
      %p69 = scmp.eq.s32.totalorder %s17, 1
      %p70 = por %p68, %p69
      %p71 = scmp.ne.s32.totalorder %s62, %s63
      %p72 = scmp.eq.s32.totalorder %s17, 0
      %p73 = por %p71, %p72
      %p74 = scmp.ne.s32.totalorder %s62, %s63
      %p75 = scmp.eq.s32.totalorder %s18, 1
      %p76 = por %p74, %p75
      %p78 = scmp.ne.s32.totalorder %s63, %s77
      %p79 = scmp.eq.s32.totalorder %s18, 0
      %p80 = por %p78, %p79
      %s82 = sadd.s32 %s81, 1
      %p85 = scmp.eq.s32.totalorder %s12, 1
      %p86 = scmp.ne.s32.totalorder %s81, %s83
      %p87 = scmp.eq.s32.totalorder %s12, 0
      %p88 = por %p86, %p87
      %p89 = scmp.ne.s32.totalorder %s81, %s83
      %p90 = scmp.eq.s32.totalorder %s17, 1
      %p91 = por %p89, %p90
      %p92 = scmp.ne.s32.totalorder %s83, %s84
      %p93 = scmp.eq.s32.totalorder %s17, 0
      %p94 = por %p92, %p93
      %p95 = scmp.ne.s32.totalorder %s83, %s84
      %p96 = scmp.eq.s32.totalorder %s18, 1
      %p97 = por %p95, %p96
      %p99 = scmp.ne.s32.totalorder %s84, %s98
      %p100 = scmp.eq.s32.totalorder %s18, 0
      %p101 = por %p99, %p100
      %s102 = ssub.s32 %s19, %s31
      %s103 = ssub.s32 %s20, %s27
      %s104 = sor.u32 %s102, %s103
      %p105 = scmp.eq.s32.totalorder %s104, 0
      %s107 = sadd.s32 %s106, 1
      %s108 = scalar_select %p105, %s106, %s107
      %p111 = pneg %p105
      %p112 = scmp.eq.s32.totalorder %s12, 1
      %p113 = por %p111, %p112
      %p114 = scmp.ne.s32.totalorder %s106, %s109
      %p115 = scmp.eq.s32.totalorder %s12, 0
      %p116 = por %p114, %p115
      %p117 = scmp.ne.s32.totalorder %s106, %s109
      %p118 = scmp.eq.s32.totalorder %s17, 1
      %p119 = por %p117, %p118
      %p120 = scmp.ne.s32.totalorder %s109, %s110
      %p121 = scmp.eq.s32.totalorder %s17, 0
      %p122 = por %p120, %p121
      %p123 = scmp.ne.s32.totalorder %s109, %s110
      %p124 = scmp.eq.s32.totalorder %s18, 1
      %p125 = por %p123, %p124
      %p127 = scmp.ne.s32.totalorder %s110, %s126
      %p128 = scmp.eq.s32.totalorder %s18, 0
      %p129 = por %p127, %p128
      %s131 = sadd.s32 %s130, 1
      %p134 = scmp.eq.s32.totalorder %s12, 1
      %p135 = scmp.ne.s32.totalorder %s130, %s132
      %p136 = scmp.eq.s32.totalorder %s12, 0
      %p137 = por %p135, %p136
      %p138 = scmp.ne.s32.totalorder %s130, %s132
      %p139 = scmp.eq.s32.totalorder %s17, 1
      %p140 = por %p138, %p139
      %p141 = scmp.ne.s32.totalorder %s132, %s133
      %p142 = scmp.eq.s32.totalorder %s17, 0
      %p143 = por %p141, %p142
      %p144 = scmp.ne.s32.totalorder %s132, %s133
      %p145 = scmp.eq.s32.totalorder %s18, 1
      %p146 = por %p144, %p145
      %p148 = scmp.ne.s32.totalorder %s133, %s147
      %p149 = scmp.eq.s32.totalorder %s18, 0
      %p150 = por %p148, %p149
      %s151 = ssub.s32 %s19, %s31
      %s152 = ssub.s32 %s20, %s27
      %s153 = sor.u32 %s151, %s152
      %p154 = scmp.eq.s32.totalorder %s153, 0
      %s156 = sadd.s32 %s155, 1
      %s157 = scalar_select %p154, %s155, %s156
      %p160 = pneg %p154
      %p161 = scmp.eq.s32.totalorder %s12, 1
      %p162 = por %p160, %p161
      %p163 = scmp.ne.s32.totalorder %s155, %s158
      %p164 = scmp.eq.s32.totalorder %s12, 0
      %p165 = por %p163, %p164
      %p166 = scmp.ne.s32.totalorder %s155, %s158
      %p167 = scmp.eq.s32.totalorder %s17, 1
      %p168 = por %p166, %p167
      %p169 = scmp.ne.s32.totalorder %s158, %s159
      %p170 = scmp.eq.s32.totalorder %s17, 0
      %p171 = por %p169, %p170
      %p172 = scmp.ne.s32.totalorder %s158, %s159
      %p173 = scmp.eq.s32.totalorder %s18, 1
      %p174 = por %p172, %p173
      %p176 = scmp.ne.s32.totalorder %s159, %s175
      %p177 = scmp.eq.s32.totalorder %s18, 0
      %p178 = por %p176, %p177
      %p179 = scmp.le.s32.totalorder 1, %s12
      %p180 = scmp.lt.s32.totalorder %s12, 3
      %p181 = pnand %p179, %p180
      %p182 = pneg %p181
      // Predicated region
      $region9: #{tpu_custom_call.1} parent=5 // pred_check
        _
      $region10: #{tpu_custom_call.1} parent=5 // pred_check_branch
        %184 = sbr.rel (%p181) target = $region12
      $region11: #{tpu_custom_call.1} parent=5 // pred_region
        %s185 = ssub.s32 %s12, 1
        // Predicated region
        $region13: #{tpu_custom_call.1} parent=11 // pred_check
          %p186 = pneg %p73
        $region14: #{tpu_custom_call.1} parent=11 // pred_check_branch
          %188 = sbr.rel (%p186) target = $region16
        $region15: #{tpu_custom_call.1} parent=11 // pred_region
          _
        $region16: #{tpu_custom_call.1} parent=11 // pred_fallthru
          _
        // Predicated region
        $region17: #{tpu_custom_call.1} parent=11 // pred_check
          %p189 = pneg %p94
        $region18: #{tpu_custom_call.1} parent=11 // pred_check_branch
          %191 = sbr.rel (%p189) target = $region20
        $region19: #{tpu_custom_call.1} parent=11 // pred_region
          _
        $region20: #{tpu_custom_call.1} parent=11 // pred_fallthru
          _
        // Predicated region
        $region21: #{tpu_custom_call.1} parent=11 // pred_check
          %p192 = pneg %p143
        $region22: #{tpu_custom_call.1} parent=11 // pred_check_branch
          %194 = sbr.rel (%p192) target = $region24
        $region23: #{tpu_custom_call.1} parent=11 // pred_region
          %s196 = ssub.s32 2048, 2048
          %197 = vsyncadd [#allocation3], %s196
          %s198 = sshll.u32 [#allocation2], 4
          %s199 = int_to_ptr.vmem [resolvable:$true] %s198
          %204 = dma.hbm_to_vmem [thread:$0]  %s4, 2048, %s199, [#allocation3], 256, 256, 16
        $region24: #{tpu_custom_call.1} parent=11 // pred_fallthru
          _
      $region12: #{tpu_custom_call.1} parent=5 // pred_fallthru
        _
      %p205 = scmp.lt.s32.totalorder %s12, 2
      // Predicated region
      $region25: #{tpu_custom_call.1} parent=5 // pred_check
        %p206 = pneg %p205
      $region26: #{tpu_custom_call.1} parent=5 // pred_check_branch
        %208 = sbr.rel (%p206) target = $region28
      $region27: #{tpu_custom_call.1} parent=5 // pred_region
        // Predicated region
        $region29: #{tpu_custom_call.1} parent=27 // pred_check
          %p209 = pneg %p46
        $region30: #{tpu_custom_call.1} parent=27 // pred_check_branch
          %211 = sbr.rel (%p209) target = $region32
        $region31: #{tpu_custom_call.1} parent=27 // pred_region
          %s212 = smul.u32 2, %s20
          %p213 = scmp.lt.s32.totalorder %s19, 1
          %s214 = scalar_select %p213, %s19, 1
          %p215 = scmp.lt.s32.totalorder %s212, 1
          %s216 = scalar_select %p215, %s212, 1
          %s217 = smul.addr %s214, 2
          %s218 = sadd.s32 %s216, %s217
          %s219 = smul.addr %s218, 4
          %s220 = scalar_lea.vmem %s0, %s219
          %s221 = smul.u32 2, %s20
        $region32: #{tpu_custom_call.1} parent=27 // pred_fallthru
          _
        // Predicated region
        $region33: #{tpu_custom_call.1} parent=27 // pred_check
          %p222 = pneg %p116
        $region34: #{tpu_custom_call.1} parent=27 // pred_check_branch
          %224 = sbr.rel (%p222) target = $region36
        $region35: #{tpu_custom_call.1} parent=27 // pred_region
          %p225 = scmp.lt.s32.totalorder %s19, 1
          %s226 = scalar_select %p225, %s19, 1
          %p227 = scmp.lt.s32.totalorder %s20, 0
          %s228 = scalar_select %p227, %s20, 0
          %s229 = sadd.s32 %s228, %s226
          %s230 = smul.addr %s229, 4
          %s231 = scalar_lea.vmem %s3, %s230
        $region36: #{tpu_custom_call.1} parent=27 // pred_fallthru
          _
      $region28: #{tpu_custom_call.1} parent=5 // pred_fallthru
        _
      %p232 = scmp.le.s32.totalorder 1, %s12
      %p233 = scmp.lt.s32.totalorder %s12, 3
      %p234 = pnand %p232, %p233
      %p235 = pneg %p234
      // Predicated region
      $region37: #{tpu_custom_call.1} parent=5 // pred_check
        _
      $region38: #{tpu_custom_call.1} parent=5 // pred_check_branch
        %237 = sbr.rel (%p234) target = $region40
      $region39: #{tpu_custom_call.1} parent=5 // pred_region
        %s238 = ssub.s32 %s12, 1
        // Predicated region
        $region41: #{tpu_custom_call.1} parent=39 // pred_check
          %p239 = pneg %p143
        $region42: #{tpu_custom_call.1} parent=39 // pred_check_branch
          %241 = sbr.rel (%p239) target = $region44
        $region43: #{tpu_custom_call.1} parent=39 // pred_region
          %242 = dma.done [#allocation3], 2048
        $region44: #{tpu_custom_call.1} parent=39 // pred_fallthru
          _
        %s243 = smul.u32 2, %s22
        %p244 = scmp.lt.s32.totalorder %s21, 1
        %s245 = scalar_select %p244, %s21, 1
        %p246 = scmp.lt.s32.totalorder %s243, 1
        %s247 = scalar_select %p246, %s243, 1
        %s248 = smul.addr %s245, 2
        %s249 = sadd.s32 %s247, %s248
        %s250 = smul.addr %s249, 4
        %s251 = scalar_lea.vmem %s0, %s250
        %p252 = pneg %p52
        %p253 = pneg %p49
        %p254 = pneg %p73
        %p255 = pneg %p70
        %p256 = pneg %p94
        %p257 = pneg %p91
        %p258 = scmp.lt.s32.totalorder %s21, 1
        %s259 = scalar_select %p258, %s21, 1
        %p260 = scmp.lt.s32.totalorder %s22, 0
        %s261 = scalar_select %p260, %s22, 0
        %s262 = sadd.s32 %s261, %s259
        %s263 = smul.addr %s262, 4
        %s264 = scalar_lea.vmem %s3, %s263
        %p265 = pneg %p122
        %p266 = pneg %p119
        %p267 = pneg %p143
        %p268 = pneg %p140
        %p269 = pneg %p171
        %p270 = pneg %p168
        %s271 = smul.u32 2, %s22
        %p272 = scmp.lt.s32.totalorder %s21, 1
        %s273 = scalar_select %p272, %s21, 1
        %p274 = scmp.lt.s32.totalorder %s271, 1
        %s275 = scalar_select %p274, %s271, 1
        %s276 = smul.addr %s273, 2
        %s277 = sadd.s32 %s275, %s276
        %s278 = smul.addr %s277, 4
        %s279 = scalar_lea.vmem %s5, %s278
        %s280 = smul.u32 2, %s22
        %p281 = scmp.lt.s32.totalorder %s21, 1
        %s282 = scalar_select %p281, %s21, 1
        %p283 = scmp.lt.s32.totalorder %s280, 1
        %s284 = scalar_select %p283, %s280, 1
        %s285 = smul.addr %s282, 2
        %s286 = sadd.s32 %s284, %s285
        %s287 = smul.addr %s286, 4
        %s288 = scalar_lea.vmem %s0, %s287
        %s289 = smul.u32 2, %s22
        %p290 = scmp.lt.s32.totalorder %s21, 1
        %s291 = scalar_select %p290, %s21, 1
        %p292 = scmp.lt.s32.totalorder %s22, 0
        %s293 = scalar_select %p292, %s22, 0
        %s294 = sadd.s32 %s293, %s291
        %s295 = smul.addr %s294, 4
        %s296 = scalar_lea.vmem %s3, %s295
        %s297 = smul.u32 2, %s22
        %p298 = scmp.lt.s32.totalorder %s21, 1
        %s299 = scalar_select %p298, %s21, 1
        %p300 = scmp.lt.s32.totalorder %s297, 1
        %s301 = scalar_select %p300, %s297, 1
        %s302 = smul.addr %s299, 2
        %s303 = sadd.s32 %s301, %s302
        %s304 = smul.addr %s303, 4
        %s305 = scalar_lea.vmem %s5, %s304
        %s306 = smul.u32 2, %s22
        %v307 = vld [vmem:[%s288] sm:$0xff]
        %vm308 = vcmp.ge.f32.partialorder %v307, 0.0
        %v309 = vmul.f32 %v307, 20.0
        %v310 = vsel %vm308, %v307, %v309
        %v311 = vld [vmem:[%s1] sm:$0x7]
        %v312 = vld [vmem:[%s2] sm:$0x7]
        %314 = vset.pattern.permute.xlu0 0
        %315 = vperm.xlu0 %314, %v312
        %v316 = vpop.permute.xlu0 %315
        %v319 = vcombine.high %v310, %v310
        %vm320 = vcmask 31744
        %v322 = vsel %vm320, %v311, 0
        %vm324 = vcmask 1043456
        %v325 = vsel %vm324, %v310, 0
        %v327 = vsel %vm324, %v319, 0
        %329 = vmatprep.subr.mxu0 %v327
        %330 = vmatpush1.msra.mxu0 %v325
        %331 = vmatprep.subr.mxu0 0.0
        %332 = vmatpush1.msra.mxu0 0.0
        %333 = vmatprep.subr.mxu0 0.0
        %334 = vmatpush1.msra.mxu0 0.0
        %335 = vmatprep.subr.mxu0 0.0
        %336 = vmatpush1.msra.mxu0 0.0
        %337 = vmatprep.subr.mxu0 0.0
        %338 = vmatpush1.msra.mxu0 0.0
        %339 = vmatprep.subr.mxu0 0.0
        %340 = vmatpush1.msra.mxu0 0.0
        %341 = vmatprep.subr.mxu0 0.0
        %342 = vmatpush1.msra.mxu0 0.0
        %343 = vmatprep.subr.mxu0 0.0
        %344 = vmatpush1.msra.mxu0 0.0
        %345 = vmatprep.subr.mxu0 0.0
        %346 = vmatpush1.msra.mxu0 0.0
        %347 = vmatprep.subr.mxu0 0.0
        %348 = vmatpush1.msra.mxu0 0.0
        %349 = vmatprep.subr.mxu0 0.0
        %350 = vmatpush1.msra.mxu0 0.0
        %351 = vmatprep.subr.mxu0 0.0
        %352 = vmatpush1.msra.mxu0 0.0
        %353 = vmatprep.subr.mxu0 0.0
        %354 = vmatpush1.msra.mxu0 0.0
        %355 = vmatprep.subr.mxu0 0.0
        %356 = vmatpush1.msra.mxu0 0.0
        %357 = vmatprep.subr.mxu0 0.0
        %358 = vmatpush1.msra.mxu0 0.0
        %359 = vmatprep.subr.mxu0 0.0
        %360 = vmatpush1.msra.mxu0 0.0
        %361 = vmatprep.subr.mxu0 0.0
        %362 = vmatpush1.msra.mxu0 0.0
        %363 = vmatprep.subr.mxu0 0.0
        %364 = vmatpush1.msra.mxu0 0.0
        %365 = vmatprep.subr.mxu0 0.0
        %366 = vmatpush1.msra.mxu0 0.0
        %367 = vmatprep.subr.mxu0 0.0
        %368 = vmatpush1.msra.mxu0 0.0
        %369 = vmatprep.subr.mxu0 0.0
        %370 = vmatpush1.msra.mxu0 0.0
        %371 = vmatprep.subr.mxu0 0.0
        %372 = vmatpush1.msra.mxu0 0.0
        %373 = vmatprep.subr.mxu0 0.0
        %374 = vmatpush1.msra.mxu0 0.0
        %375 = vmatprep.subr.mxu0 0.0
        %376 = vmatpush1.msra.mxu0 0.0
        %377 = vmatprep.subr.mxu0 0.0
        %378 = vmatpush1.msra.mxu0 0.0
        %379 = vmatprep.subr.mxu0 0.0
        %380 = vmatpush1.msra.mxu0 0.0
        %381 = vmatprep.subr.mxu0 0.0
        %382 = vmatpush1.msra.mxu0 0.0
        %383 = vmatprep.subr.mxu0 0.0
        %384 = vmatpush1.msra.mxu0 0.0
        %385 = vmatprep.subr.mxu0 0.0
        %386 = vmatpush1.msra.mxu0 0.0
        %387 = vmatprep.subr.mxu0 0.0
        %388 = vmatpush1.msra.mxu0 0.0
        %389 = vmatprep.subr.mxu0 0.0
        %390 = vmatpush1.msra.mxu0 0.0
        %391 = vmatprep.subr.mxu0 0.0
        %392 = vmatpush1.msra.mxu0 0.0
        %393 = vmatprep.mubr.f32.mxu0 0.0
        %394 = vmatmul.mubr.f32.gmra.mrb[0].mxu0 %v322
        %v395 = vpop.f32.mrb[0].mxu0
        %v396 = vadd.f32 %v316, %v395
        %v397 = vpop.f32.mrb[0].mxu0
        %v398 = vadd.f32 %v316, %v397
        %399 = vdwg.mxu0
        %v400 = vld [vmem:[%s296] sm:$0x7]
        %v401 = vld [vmem:[#allocation2] sm:$0xff]
        %v402 = vld [vmem:[#allocation2 + $0x8] sm:$0xff]
        %v403 = vld [vmem:[#allocation2 + $0x10] sm:$0xff]
        %v404 = vld [vmem:[#allocation2 + $0x18] sm:$0xff]
        %v405 = vld [vmem:[#allocation2 + $0x20] sm:$0xff]
        %v406 = vld [vmem:[#allocation2 + $0x28] sm:$0xff]
        %v407 = vld [vmem:[#allocation2 + $0x30] sm:$0xff]
        %v408 = vld [vmem:[#allocation2 + $0x38] sm:$0xff]
        %v409 = vld [vmem:[#allocation2 + $0x40] sm:$0xff]
        %v410 = vld [vmem:[#allocation2 + $0x48] sm:$0xff]
        %v411 = vld [vmem:[#allocation2 + $0x50] sm:$0xff]
        %v412 = vld [vmem:[#allocation2 + $0x58] sm:$0xff]
        %v413 = vld [vmem:[#allocation2 + $0x60] sm:$0xff]
        %v414 = vld [vmem:[#allocation2 + $0x68] sm:$0xff]
        %v415 = vld [vmem:[#allocation2 + $0x70] sm:$0xff]
        %v416 = vld [vmem:[#allocation2 + $0x78] sm:$0xff]
        %vm417 = vcmask 523264
        %v419 = vsel %vm417, %v400, 0
        %421 = vmatprep.subr.mxu0 %v402
        %422 = vmatpush1.msra.mxu0 %v401
        %423 = vmatprep.subr.mxu0 %v404
        %424 = vmatpush1.msra.mxu0 %v403
        %425 = vmatprep.subr.mxu0 %v406
        %426 = vmatpush1.msra.mxu0 %v405
        %427 = vmatprep.subr.mxu0 %v408
        %428 = vmatpush1.msra.mxu0 %v407
        %429 = vmatprep.subr.mxu0 %v410
        %430 = vmatpush1.msra.mxu0 %v409
        %431 = vmatprep.subr.mxu0 %v412
        %432 = vmatpush1.msra.mxu0 %v411
        %433 = vmatprep.subr.mxu0 %v414
        %434 = vmatpush1.msra.mxu0 %v413
        %435 = vmatprep.subr.mxu0 %v416
        %436 = vmatpush1.msra.mxu0 %v415
        %437 = vmatprep.subr.mxu0 0.0
        %438 = vmatpush1.msra.mxu0 0.0
        %439 = vmatprep.subr.mxu0 0.0
        %440 = vmatpush1.msra.mxu0 0.0
        %441 = vmatprep.subr.mxu0 0.0
        %442 = vmatpush1.msra.mxu0 0.0
        %443 = vmatprep.subr.mxu0 0.0
        %444 = vmatpush1.msra.mxu0 0.0
        %445 = vmatprep.subr.mxu0 0.0
        %446 = vmatpush1.msra.mxu0 0.0
        %447 = vmatprep.subr.mxu0 0.0
        %448 = vmatpush1.msra.mxu0 0.0
        %449 = vmatprep.subr.mxu0 0.0
        %450 = vmatpush1.msra.mxu0 0.0
        %451 = vmatprep.subr.mxu0 0.0
        %452 = vmatpush1.msra.mxu0 0.0
        %453 = vmatprep.subr.mxu0 0.0
        %454 = vmatpush1.msra.mxu0 0.0
        %455 = vmatprep.subr.mxu0 0.0
        %456 = vmatpush1.msra.mxu0 0.0
        %457 = vmatprep.subr.mxu0 0.0
        %458 = vmatpush1.msra.mxu0 0.0
        %459 = vmatprep.subr.mxu0 0.0
        %460 = vmatpush1.msra.mxu0 0.0
        %461 = vmatprep.subr.mxu0 0.0
        %462 = vmatpush1.msra.mxu0 0.0
        %463 = vmatprep.subr.mxu0 0.0
        %464 = vmatpush1.msra.mxu0 0.0
        %465 = vmatprep.subr.mxu0 0.0
        %466 = vmatpush1.msra.mxu0 0.0
        %467 = vmatprep.subr.mxu0 0.0
        %468 = vmatpush1.msra.mxu0 0.0
        %469 = vmatprep.subr.mxu0 0.0
        %470 = vmatpush1.msra.mxu0 0.0
        %471 = vmatprep.subr.mxu0 0.0
        %472 = vmatpush1.msra.mxu0 0.0
        %473 = vmatprep.subr.mxu0 0.0
        %474 = vmatpush1.msra.mxu0 0.0
        %475 = vmatprep.subr.mxu0 0.0
        %476 = vmatpush1.msra.mxu0 0.0
        %477 = vmatprep.subr.mxu0 0.0
        %478 = vmatpush1.msra.mxu0 0.0
        %479 = vmatprep.subr.mxu0 0.0
        %480 = vmatpush1.msra.mxu0 0.0
        %481 = vmatprep.subr.mxu0 0.0
        %482 = vmatpush1.msra.mxu0 0.0
        %483 = vmatprep.subr.mxu0 0.0
        %484 = vmatpush1.msra.mxu0 0.0
        %485 = vmatprep.mubr.f32.mxu0 0.0
        %486 = vmatmul.mubr.f32.gmra.mrb[0].mxu0 %v419
        %v487 = vpop.f32.mrb[0].mxu0
        %v488 = vadd.f32 0.0, %v487
        %v489 = vpop.f32.mrb[0].mxu0
        %v490 = vadd.f32 0.0, %v489
        %491 = vdwg.mxu0
        %v492 = vadd.f32 %v396, %v488
        %v493 = vadd.f32 %v398, %v490
        %v496 = vcombine.low %v492, %v493
        %498 = vst [vmem:[%s305] sm:$0x77] %v496
        %s499 = smul.u32 2, %s22
        %p500 = scmp.lt.s32.totalorder %s21, 1
        %s501 = scalar_select %p500, %s21, 1
        %p502 = scmp.lt.s32.totalorder %s499, 1
        %s503 = scalar_select %p502, %s499, 1
        %s504 = smul.addr %s501, 2
        %s505 = sadd.s32 %s503, %s504
        %s506 = smul.addr %s505, 4
        %s507 = scalar_lea.vmem %s5, %s506
        // Predicated region
        $region45: #{tpu_custom_call.1} parent=39 // pred_check
          %p508 = pneg %p168
        $region46: #{tpu_custom_call.1} parent=39 // pred_check_branch
          %510 = sbr.rel (%p508) target = $region48
        $region47: #{tpu_custom_call.1} parent=39 // pred_region
          %s511 = smul.u32 2, %s22
        $region48: #{tpu_custom_call.1} parent=39 // pred_fallthru
          _
      $region40: #{tpu_custom_call.1} parent=5 // pred_fallthru
        _
      %p512 = scmp.le.s32.totalorder 2, %s12
      // Predicated region
      $region49: #{tpu_custom_call.1} parent=5 // pred_check
        %p513 = pneg %p512
      $region50: #{tpu_custom_call.1} parent=5 // pred_check_branch
        %515 = sbr.rel (%p513) target = $region52
      $region51: #{tpu_custom_call.1} parent=5 // pred_region
        %s516 = ssub.s32 %s12, 2
        // Predicated region
        $region53: #{tpu_custom_call.1} parent=51 // pred_check
          %p517 = pneg %p174
        $region54: #{tpu_custom_call.1} parent=51 // pred_check_branch
          %519 = sbr.rel (%p517) target = $region56
        $region55: #{tpu_custom_call.1} parent=51 // pred_region
          %s520 = smul.u32 2, %s24
          %p521 = scmp.lt.s32.totalorder %s23, 1
          %s522 = scalar_select %p521, %s23, 1
          %p523 = scmp.lt.s32.totalorder %s520, 1
          %s524 = scalar_select %p523, %s520, 1
          %s525 = smul.addr %s522, 2
          %s526 = sadd.s32 %s524, %s525
          %s527 = smul.addr %s526, 4
          %s528 = scalar_lea.vmem %s5, %s527
        $region56: #{tpu_custom_call.1} parent=51 // pred_fallthru
          _
      $region52: #{tpu_custom_call.1} parent=5 // pred_fallthru
        _
    $region6: #{tpu_custom_call.1} parent=1 // loop_footer
      %s16 = sadd.s32 1, %s12
    $region7: #{tpu_custom_call.1} parent=1 // loop_footer_branch
      %11 = sbr.rel target = $region3
    $region8: #{tpu_custom_call.1} parent=1 // loop_exit
      _
    %529 = vsyncpa [#allocation3], 1
    %s530 = scalar_lea.sflag [#allocation3], 1
    %531 = vsyncpa %s530, 1

</llo_original>
